<compile_context>
chip_gen: v6e
topology: v6e:2x2x1
jax: 0.10.0
libtpu: 0.0.40
codegen_flags: <defaults>
</compile_context>

<pallas_src>
import jax
import jax.numpy as jnp
from jax.experimental import pallas as pl
from jax.experimental.pallas import tpu as pltpu


def _round_up(x, m):
    return ((x + m - 1) // m) * m


def _vmem_capacity_bytes():
    """Per-TensorCore VMEM capacity; conservative fallback if query fails."""
    try:
        info = pltpu.get_tpu_info()
        cap = int(getattr(info, "vmem_capacity_bytes", 0))
        if cap > 0:
            return cap
    except Exception:
        pass
    return 64 * 2**20  # v7x per-TC size (the smallest of v5e/v6e/v7x)


# -----------------------------------------------------------------------------
# Fused kernel: a chain of (matmul -> +bias -> ReLU) layers in one body.
# -----------------------------------------------------------------------------
def _make_fcnet_kernel(num_layers, compute_dtype):
    """Kernel signature: (x_ref, w0, b0, w1, b1, ..., o_ref)."""

    def kernel(x_ref, *refs):
        o_ref = refs[-1]
        wb = refs[:-1]                                  # 2 * num_layers refs
        h = x_ref[...]                                  # (TB, in_p) act dtype
        for l in range(num_layers):
            w = wb[2 * l][...]                          # (in_p, out_p) compute
            b = wb[2 * l + 1][...]                      # (1, out_p)    f32
            # MXU matmul in compute_dtype, f32 accumulation.  astype is a
            # no-op when h is already compute_dtype (layer 0 with bf16 DMA).
            y = jnp.dot(h.astype(compute_dtype), w,
                        preferred_element_type=jnp.float32)
            h = jnp.maximum(y + b, 0.0)                 # bias + ReLU in f32
        o_ref[...] = h.astype(o_ref.dtype)

    return kernel


# -----------------------------------------------------------------------------
# One-time parameter preparation (analogue of weight_norm's pre-forward hook).
# -----------------------------------------------------------------------------
def fcnet_prepare_params(params, compute_dtype=jnp.bfloat16):
    """Fold g/||v||_F into the weight, transpose to (in, out), pad to 128.

    bf16 weights are a good default on every TPU generation (v5e/v6e/v7x MXUs
    all run bf16 at full rate); pass compute_dtype=jnp.float32 for bit-exact
    parity with the PyTorch f32 math.
    """
    layers = []
    out_dim = None
    for (v, g, b) in params:
        od, idim = v.shape
        ip, op = _round_up(idim, 128), _round_up(od, 128)
        # weight_norm(dim=None): w = g * v / ||v||_F  (rsqrt -> done once here).
        scale = g * jax.lax.rsqrt(jnp.sum(v.astype(jnp.float32) ** 2))
        w_t = scale * jnp.transpose(v).astype(jnp.float32)       # (idim, od)
        w_pad = jnp.zeros((ip, op), jnp.float32).at[:idim, :od].set(w_t)
        b_pad = jnp.zeros((1, op), jnp.float32).at[0, :od].set(
            b.astype(jnp.float32))
        layers.append((w_pad.astype(compute_dtype), b_pad))
        out_dim = od
    return {"layers": layers, "out_dim": out_dim, "compute_dtype": compute_dtype}


def _vmem_estimate_bytes(tb, layers, act_in_itemsize, out_itemsize,
                         weight_buffers):
    """VMEM footprint: pipelined act tiles + resident weights + intermediates."""
    in_p = layers[0][0].shape[0]
    out_p = layers[-1][0].shape[1]
    est = 2 * tb * in_p * act_in_itemsize            # double-buffered input
    est += 2 * tb * out_p * out_itemsize             # double-buffered output
    for (w, b) in layers:
        est += weight_buffers * (w.size * w.dtype.itemsize
                                 + b.size * b.dtype.itemsize)
    max_feat = max(max(w.shape) for (w, _) in layers)
    est += 2 * tb * max_feat * 4                     # f32 intermediates
    return est


def _build_in_specs(tb, in_p, layers, single_buffer_weights):
    specs = [pl.BlockSpec((tb, in_p), lambda i: (i, 0))]
    for (w, _b) in layers:
        ip, op = w.shape
        if single_buffer_weights:
            # Constant index_map -> second pipeline buffer is pure VMEM waste.
            specs.append(pl.BlockSpec((ip, op), lambda i: (0, 0),
                                      pipeline_mode=pl.Buffered(1)))
            specs.append(pl.BlockSpec((1, op), lambda i: (0, 0),
                                      pipeline_mode=pl.Buffered(1)))
        else:
            specs.append(pl.BlockSpec((ip, op), lambda i: (0, 0)))
            specs.append(pl.BlockSpec((1, op), lambda i: (0, 0)))
    return specs


# -----------------------------------------------------------------------------
# One fused pallas_call over a (contiguous) group of layers.
# -----------------------------------------------------------------------------
def _run_group(x_pad, layers, compute_dtype, out_dtype, tb, vmem_cap):
    num_layers = len(layers)
    b_pad, in_p = x_pad.shape
    out_p = layers[-1][0].shape[1]
    grid_b = b_pad // tb

    inputs = [x_pad]
    for (w, b) in layers:
        inputs.append(w)
        inputs.append(b)

    out_specs = pl.BlockSpec((tb, out_p), lambda i: (i, 0))
    out_shape = jax.ShapeDtypeStruct((b_pad, out_p), out_dtype)

    # Advisory cost estimate so XLA schedules the custom call sensibly.
    flops = 0
    bytes_accessed = (x_pad.size * x_pad.dtype.itemsize
                      + b_pad * out_p * jnp.dtype(out_dtype).itemsize)
    for (w, b) in layers:
        ip, op = w.shape
        flops += 2 * b_pad * ip * op
        bytes_accessed += w.size * w.dtype.itemsize + b.size * b.dtype.itemsize
    cost = pl.CostEstimate(flops=flops, transcendentals=0,
                           bytes_accessed=bytes_accessed)

    kernel = _make_fcnet_kernel(num_layers, compute_dtype)

    def build_call(single_buffer_weights):
        in_specs = _build_in_specs(tb, in_p, layers, single_buffer_weights)
        w_bufs = 1 if single_buffer_weights else 2
        est = _vmem_estimate_bytes(tb, layers, x_pad.dtype.itemsize,
                                   jnp.dtype(out_dtype).itemsize, w_bufs)
        # Generation-aware cap: leave headroom for compiler-internal scratch
        # (~56 MiB usable on v7x's 64 MiB TC, ~112 MiB on v5e/v6e's 128 MiB).
        headroom = max(8 * 2**20, vmem_cap // 8)
        cap = vmem_cap - headroom
        vmem_limit = int(min(max(int(est * 1.25), 32 * 2**20), cap))
        return pl.pallas_call(
            kernel,
            out_shape=out_shape,
            grid_spec=pltpu.PrefetchScalarGridSpec(
                num_scalar_prefetch=0,
                grid=(grid_b,),
                in_specs=in_specs,
                out_specs=out_specs,
            ),
            compiler_params=pltpu.CompilerParams(
                dimension_semantics=("parallel",),   # shards across v7x's 2 TCs
                vmem_limit_bytes=vmem_limit,
            ),
            cost_estimate=cost,
        )

    try:
        return build_call(True)(*inputs)
    except Exception:
        # Fallback if pipeline_mode=pl.Buffered(1) is rejected by this JAX/
        # Mosaic version: default double-buffered resident weights.
        return build_call(False)(*inputs)


# -----------------------------------------------------------------------------
# Forward: fused layer-chain, batch-tiled parallel grid, group split if needed.
# -----------------------------------------------------------------------------
def fcnet_forward(x, prepared, *, tile_b=512, out_dtype=None):
    layers = prepared["layers"]
    out_dim = prepared["out_dim"]
    compute_dtype = jnp.dtype(prepared["compute_dtype"])

    # nn.Linear semantics: arbitrary leading dims, last dim is the feature dim.
    lead_shape = x.shape[:-1]
    in_dim = x.shape[-1]
    x2 = x.reshape(-1, in_dim)
    B = x2.shape[0]
    if out_dtype is None:
        out_dtype = x.dtype

    in_p = layers[0][0].shape[0]
    out_p = layers[-1][0].shape[1]

    # Activations are DMA'd in the compute dtype (bf16 halves HBM/VMEM bytes).
    act_dtype = compute_dtype if compute_dtype == jnp.bfloat16 else jnp.float32
    mult = 16 if jnp.dtype(act_dtype).itemsize == 2 else 8   # sublanes / vreg

    # Batch tile: big (less per-step overhead), sublane aligned, and split into
    # at least two tiles when B permits so both v7x TensorCores get work.
    min_tiles = 2 if B >= 2 * mult else 1
    grid_target = max(pl.cdiv(B, max(tile_b, 1)), min_tiles)
    tb = _round_up(pl.cdiv(B, grid_target), mult)
    tb = max(mult, min(tb, _round_up(max(tile_b, 1), mult)))
    grid_b = pl.cdiv(B, tb)
    b_pad = grid_b * tb

    # Pad / cast the input only when actually needed (extra HBM copies are not
    # hidden by the kernel pipeline).
    if b_pad != B or in_p != in_dim:
        x_pad = jnp.zeros((b_pad, in_p), act_dtype).at[:B, :in_dim].set(
            x2.astype(act_dtype))
    else:
        x_pad = x2 if x2.dtype == act_dtype else x2.astype(act_dtype)

    # Group layers so each group's resident (single-buffered) weights fit the
    # per-generation VMEM weight budget; one group == one fused pallas_call.
    vmem_cap = _vmem_capacity_bytes()
    weight_budget = vmem_cap // 2
    groups, cur, cur_bytes = [], [], 0
    for (w, b) in layers:
        wbytes = w.size * w.dtype.itemsize + b.size * b.dtype.itemsize
        if cur and cur_bytes + wbytes > weight_budget:
            groups.append(cur)
            cur, cur_bytes = [], 0
        cur.append((w, b))
        cur_bytes += wbytes
    groups.append(cur)
    # TODO(synk): a single layer whose folded weight alone exceeds the weight
    # budget would need a reduction-tiled (in_dim-chunked) accumulator path.

    h = x_pad
    for gi, group in enumerate(groups):
        last = gi == len(groups) - 1
        g_out_dtype = out_dtype if last else act_dtype
        h = _run_group(h, group, compute_dtype, g_out_dtype, tb, vmem_cap)

    if b_pad != B or out_p != out_dim:
        h = h[:B, :out_dim]
    return h.reshape(*lead_shape, out_dim)


# -----------------------------------------------------------------------------
# Init + pure-JAX reference (PyTorch semantics) for verification.
# -----------------------------------------------------------------------------
def fcnet_init_params(key, dims):
    """v ~ N(0, 0.02), g = ||v||_F (weight_norm init), b ~ N(0, 0.02)."""
    params = []
    for i in range(len(dims) - 1):
        key, kv, kb = jax.random.split(key, 3)
        v = 0.02 * jax.random.normal(kv, (dims[i + 1], dims[i]), jnp.float32)
        g = jnp.sqrt(jnp.sum(v * v))
        b = 0.02 * jax.random.normal(kb, (dims[i + 1],), jnp.float32)
        params.append((v, g, b))
    return params


def fcnet_reference(x, params):
    for (v, g, b) in params:
        w = g * v / jnp.sqrt(jnp.sum(v * v))
        x = jnp.maximum(x @ w.T + b, 0.0)
    return x


if __name__ == "__main__":
    # TODO(synk): dropout>0 path (nn.Dropout) not implemented; module default dropout=0.
    # Small shapes: FCNet(dims=[32, 64, 16]), batch = 8.
    dims = [32, 64, 16]
    B = 8

    key = jax.random.PRNGKey(0)
    key, kx = jax.random.split(key)
    x = jax.random.normal(kx, (B, dims[0]), jnp.float32)
    params = fcnet_init_params(key, dims)
    ref = fcnet_reference(x, params)

    # f32 path (exact match with the PyTorch math).
    prep_f32 = fcnet_prepare_params(params, compute_dtype=jnp.float32)
    out_f32 = jax.block_until_ready(fcnet_forward(x, prep_f32))
    assert out_f32.shape == (B, dims[-1])
    assert jnp.allclose(out_f32, ref, atol=1e-5, rtol=1e-5), "f32 mismatch vs reference"

    # bf16 MXU path (recommended on v5e/v6e/v7x): bf16 operands, f32 accumulation.
    prep_bf16 = fcnet_prepare_params(params, compute_dtype=jnp.bfloat16)
    out_bf16 = jax.block_until_ready(fcnet_forward(x, prep_bf16))
    assert out_bf16.shape == (B, dims[-1])
    assert jnp.allclose(out_bf16, ref, atol=2e-2, rtol=2e-2), "bf16 mismatch vs reference"

    # Exercise the multi-tile (grid_b > 1, "parallel" batch grid) path.
    B2 = 96
    x2 = jax.random.normal(jax.random.PRNGKey(1), (B2, dims[0]), jnp.float32)
    ref2 = fcnet_reference(x2, params)
    out2 = jax.block_until_ready(fcnet_forward(x2, prep_f32, tile_b=64))
    assert out2.shape == (B2, dims[-1])
    assert jnp.allclose(out2, ref2, atol=1e-5, rtol=1e-5), "multi-tile mismatch vs reference"

    print("KERNEL_OK")
</pallas_src>

<mosaic_0001>
module attributes {stable_mosaic.version = 11 : i64} {
  func.func @kernel(%arg0: i32, %arg1: memref<8x128xf32, #tpu.memory_space<vmem>>, %arg2: memref<128x128xf32, #tpu.memory_space<vmem>>, %arg3: memref<1x128xf32, #tpu.memory_space<vmem>>, %arg4: memref<128x128xf32, #tpu.memory_space<vmem>>, %arg5: memref<1x128xf32, #tpu.memory_space<vmem>>, %arg6: memref<8x128xf32, #tpu.memory_space<vmem>>) attributes {dimension_semantics = [#tpu.dimension_semantics<parallel>], iteration_bounds = array<i64: 1>, scalar_prefetch = 0 : i64, scratch_operands = 0 : i64, tpu.core_type = #tpu.core_type<tc>, window_params = [{transform_indices = @transform_0, window_bounds = array<i64: 8, 128>}, {pipeline_mode = #tpu.pipeline_mode<synchronous>, transform_indices = @transform_1, window_bounds = array<i64: 128, 128>}, {pipeline_mode = #tpu.pipeline_mode<synchronous>, transform_indices = @transform_2, window_bounds = array<i64: 1, 128>}, {pipeline_mode = #tpu.pipeline_mode<synchronous>, transform_indices = @transform_3, window_bounds = array<i64: 128, 128>}, {pipeline_mode = #tpu.pipeline_mode<synchronous>, transform_indices = @transform_4, window_bounds = array<i64: 1, 128>}, {transform_indices = @transform_5, window_bounds = array<i64: 8, 128>}]} {
    %c0 = arith.constant 0 : index
    %c0_0 = arith.constant 0 : index
    %0 = vector.load %arg1[%c0, %c0_0] : memref<8x128xf32, #tpu.memory_space<vmem>>, vector<8x128xf32>
    %c0_1 = arith.constant 0 : index
    %c0_2 = arith.constant 0 : index
    %1 = vector.load %arg2[%c0_1, %c0_2] : memref<128x128xf32, #tpu.memory_space<vmem>>, vector<128x128xf32>
    %c0_3 = arith.constant 0 : index
    %c0_4 = arith.constant 0 : index
    %2 = vector.load %arg3[%c0_3, %c0_4] : memref<1x128xf32, #tpu.memory_space<vmem>>, vector<1x128xf32>
    %cst = arith.constant dense<0.000000e+00> : vector<8x128xf32>
    %3 = tpu.matmul %0, %1, %cst {dimension_numbers = #tpu.dot_dimension_numbers<[1], [0], [0], [1], [0, 0, 1, 1], [], []>} : vector<8x128xf32>, vector<128x128xf32>, vector<8x128xf32> -> vector<8x128xf32>
    %4 = vector.broadcast %2 : vector<1x128xf32> to vector<8x128xf32>
    %5 = arith.addf %3, %4 : vector<8x128xf32>
    %cst_5 = arith.constant 0.000000e+00 : f32
    %6 = vector.broadcast %cst_5 : f32 to vector<8x128xf32>
    %7 = arith.maximumf %5, %6 : vector<8x128xf32>
    %c0_6 = arith.constant 0 : index
    %c0_7 = arith.constant 0 : index
    %8 = vector.load %arg4[%c0_6, %c0_7] : memref<128x128xf32, #tpu.memory_space<vmem>>, vector<128x128xf32>
    %c0_8 = arith.constant 0 : index
    %c0_9 = arith.constant 0 : index
    %9 = vector.load %arg5[%c0_8, %c0_9] : memref<1x128xf32, #tpu.memory_space<vmem>>, vector<1x128xf32>
    %cst_10 = arith.constant dense<0.000000e+00> : vector<8x128xf32>
    %10 = tpu.matmul %7, %8, %cst_10 {dimension_numbers = #tpu.dot_dimension_numbers<[1], [0], [0], [1], [0, 0, 1, 1], [], []>} : vector<8x128xf32>, vector<128x128xf32>, vector<8x128xf32> -> vector<8x128xf32>
    %11 = vector.broadcast %9 : vector<1x128xf32> to vector<8x128xf32>
    %12 = arith.addf %10, %11 : vector<8x128xf32>
    %cst_11 = arith.constant 0.000000e+00 : f32
    %13 = vector.broadcast %cst_11 : f32 to vector<8x128xf32>
    %14 = arith.maximumf %12, %13 : vector<8x128xf32>
    %c0_12 = arith.constant 0 : index
    %c0_13 = arith.constant 0 : index
    %15 = vector.load %arg6[%c0_12, %c0_13] : memref<8x128xf32, #tpu.memory_space<vmem>>, vector<8x128xf32>
    tpu.vector_store %arg6[%c0_12, %c0_13], %14 {strides = array<i32>} : memref<8x128xf32, #tpu.memory_space<vmem>>, vector<8x128xf32>,
    return
  }
  func.func @transform_0(%arg0: i32) -> (i32, i32) {
    %c0_i32 = arith.constant 0 : i32
    %c0_i32_0 = arith.constant 0 : i32
    return %arg0, %c0_i32 : i32, i32
  }
  func.func @transform_1(%arg0: i32) -> (i32, i32) {
    %c0_i32 = arith.constant 0 : i32
    %c0_i32_0 = arith.constant 0 : i32
    %c0_i32_1 = arith.constant 0 : i32
    return %c0_i32, %c0_i32_0 : i32, i32
  }
  func.func @transform_2(%arg0: i32) -> (i32, i32) {
    %c0_i32 = arith.constant 0 : i32
    %c0_i32_0 = arith.constant 0 : i32
    %c0_i32_1 = arith.constant 0 : i32
    return %c0_i32, %c0_i32_0 : i32, i32
  }
  func.func @transform_3(%arg0: i32) -> (i32, i32) {
    %c0_i32 = arith.constant 0 : i32
    %c0_i32_0 = arith.constant 0 : i32
    %c0_i32_1 = arith.constant 0 : i32
    return %c0_i32, %c0_i32_0 : i32, i32
  }
  func.func @transform_4(%arg0: i32) -> (i32, i32) {
    %c0_i32 = arith.constant 0 : i32
    %c0_i32_0 = arith.constant 0 : i32
    %c0_i32_1 = arith.constant 0 : i32
    return %c0_i32, %c0_i32_0 : i32, i32
  }
  func.func @transform_5(%arg0: i32) -> (i32, i32) {
    %c0_i32 = arith.constant 0 : i32
    %c0_i32_0 = arith.constant 0 : i32
    return %arg0, %c0_i32 : i32, i32
  }
}

module attributes {stable_mosaic.version = 11 : i64} {
  func.func @kernel(%arg0: i32, %arg1: memref<8x128xf32, #tpu.memory_space<vmem>>, %arg2: memref<128x128xf32, #tpu.memory_space<vmem>>, %arg3: memref<1x128xf32, #tpu.memory_space<vmem>>, %arg4: memref<128x128xf32, #tpu.memory_space<vmem>>, %arg5: memref<1x128xf32, #tpu.memory_space<vmem>>, %arg6: memref<8x128xf32, #tpu.memory_space<vmem>>) attributes {dimension_semantics = [#tpu.dimension_semantics<parallel>], iteration_bounds = array<i64: 1>, scalar_prefetch = 0 : i64, scratch_operands = 0 : i64, tpu.core_type = #tpu.core_type<tc>, window_params = [{transform_indices = @transform_0, window_bounds = array<i64: 8, 128>}, {pipeline_mode = #tpu.pipeline_mode<synchronous>, transform_indices = @transform_1, window_bounds = array<i64: 128, 128>}, {pipeline_mode = #tpu.pipeline_mode<synchronous>, transform_indices = @transform_2, window_bounds = array<i64: 1, 128>}, {pipeline_mode = #tpu.pipeline_mode<synchronous>, transform_indices = @transform_3, window_bounds = array<i64: 128, 128>}, {pipeline_mode = #tpu.pipeline_mode<synchronous>, transform_indices = @transform_4, window_bounds = array<i64: 1, 128>}, {transform_indices = @transform_5, window_bounds = array<i64: 8, 128>}]} {
    %c0 = arith.constant 0 : index
    %c0_0 = arith.constant 0 : index
    %0 = vector.load %arg1[%c0, %c0_0] : memref<8x128xf32, #tpu.memory_space<vmem>>, vector<8x128xf32>
    %c0_1 = arith.constant 0 : index
    %c0_2 = arith.constant 0 : index
    %1 = vector.load %arg2[%c0_1, %c0_2] : memref<128x128xf32, #tpu.memory_space<vmem>>, vector<128x128xf32>
    %c0_3 = arith.constant 0 : index
    %c0_4 = arith.constant 0 : index
    %2 = vector.load %arg3[%c0_3, %c0_4] : memref<1x128xf32, #tpu.memory_space<vmem>>, vector<1x128xf32>
    %cst = arith.constant dense<0.000000e+00> : vector<8x128xf32>
    %3 = tpu.matmul %0, %1, %cst {dimension_numbers = #tpu.dot_dimension_numbers<[1], [0], [0], [1], [0, 0, 1, 1], [], []>} : vector<8x128xf32>, vector<128x128xf32>, vector<8x128xf32> -> vector<8x128xf32>
    %4 = vector.broadcast %2 : vector<1x128xf32> to vector<8x128xf32>
    %5 = arith.addf %3, %4 : vector<8x128xf32>
    %cst_5 = arith.constant 0.000000e+00 : f32
    %6 = vector.broadcast %cst_5 : f32 to vector<8x128xf32>
    %7 = arith.maximumf %5, %6 : vector<8x128xf32>
    %c0_6 = arith.constant 0 : index
    %c0_7 = arith.constant 0 : index
    %8 = vector.load %arg4[%c0_6, %c0_7] : memref<128x128xf32, #tpu.memory_space<vmem>>, vector<128x128xf32>
    %c0_8 = arith.constant 0 : index
    %c0_9 = arith.constant 0 : index
    %9 = vector.load %arg5[%c0_8, %c0_9] : memref<1x128xf32, #tpu.memory_space<vmem>>, vector<1x128xf32>
    %cst_10 = arith.constant dense<0.000000e+00> : vector<8x128xf32>
    %10 = tpu.matmul %7, %8, %cst_10 {dimension_numbers = #tpu.dot_dimension_numbers<[1], [0], [0], [1], [0, 0, 1, 1], [], []>} : vector<8x128xf32>, vector<128x128xf32>, vector<8x128xf32> -> vector<8x128xf32>
    %11 = vector.broadcast %9 : vector<1x128xf32> to vector<8x128xf32>
    %12 = arith.addf %10, %11 : vector<8x128xf32>
    %cst_11 = arith.constant 0.000000e+00 : f32
    %13 = vector.broadcast %cst_11 : f32 to vector<8x128xf32>
    %14 = arith.maximumf %12, %13 : vector<8x128xf32>
    %c0_12 = arith.constant 0 : index
    %c0_13 = arith.constant 0 : index
    %15 = vector.load %arg6[%c0_12, %c0_13] : memref<8x128xf32, #tpu.memory_space<vmem>>, vector<8x128xf32>
    tpu.vector_store %arg6[%c0_12, %c0_13], %14 {strides = array<i32>} : memref<8x128xf32, #tpu.memory_space<vmem>>, vector<8x128xf32>,
    return
  }
  func.func @transform_0(%arg0: i32) -> (i32, i32) {
    %c0_i32 = arith.constant 0 : i32
    %c0_i32_0 = arith.constant 0 : i32
    return %arg0, %c0_i32 : i32, i32
  }
  func.func @transform_1(%arg0: i32) -> (i32, i32) {
    %c0_i32 = arith.constant 0 : i32
    %c0_i32_0 = arith.constant 0 : i32
    %c0_i32_1 = arith.constant 0 : i32
    return %c0_i32, %c0_i32_0 : i32, i32
  }
  func.func @transform_2(%arg0: i32) -> (i32, i32) {
    %c0_i32 = arith.constant 0 : i32
    %c0_i32_0 = arith.constant 0 : i32
    %c0_i32_1 = arith.constant 0 : i32
    return %c0_i32, %c0_i32_0 : i32, i32
  }
  func.func @transform_3(%arg0: i32) -> (i32, i32) {
    %c0_i32 = arith.constant 0 : i32
    %c0_i32_0 = arith.constant 0 : i32
    %c0_i32_1 = arith.constant 0 : i32
    return %c0_i32, %c0_i32_0 : i32, i32
  }
  func.func @transform_4(%arg0: i32) -> (i32, i32) {
    %c0_i32 = arith.constant 0 : i32
    %c0_i32_0 = arith.constant 0 : i32
    %c0_i32_1 = arith.constant 0 : i32
    return %c0_i32, %c0_i32_0 : i32, i32
  }
  func.func @transform_5(%arg0: i32) -> (i32, i32) {
    %c0_i32 = arith.constant 0 : i32
    %c0_i32_0 = arith.constant 0 : i32
    return %arg0, %c0_i32 : i32, i32
  }
}

</mosaic_0001>

<llo_original>
// kernel: tpu_custom_call.1
$region0: #{tpu_custom_call.1}
  #allocation0 [shape = 'u32[]', space=smem, size = 0x4, offset = 0x4, fixed_abs, tag = 'smem constant byte address 0x4 - core index']
  #allocation1 [shape = 'u32[144,128]{1,0:T(1,128)}', space=vmem, size = 0x12000, scoped, tag = 'internal scratch']
  %s0 = inlined_call_operand.hbm [shape: f32[8,128], index: 0, kind: input, shape index: {}]
  %s1 = inlined_call_operand.hbm [shape: f32[128,128], index: 1, kind: input, shape index: {}]
  %s2 = inlined_call_operand.vmem [shape: f32[1,128], index: 2, kind: input, shape index: {}]
  %s3 = inlined_call_operand.hbm [shape: f32[128,128], index: 3, kind: input, shape index: {}]
  %s4 = inlined_call_operand.vmem [shape: f32[1,128], index: 4, kind: input, shape index: {}]
  %s5 = inlined_call_operand.hbm [shape: f32[8,128], index: 5, kind: output, shape index: {}]
  %s6 = sld [smem:[#allocation0]]
  $region42: #{tpu_custom_call.1} parent=0
    _
  %s8 = ssub.s32 1, %s6
  %s9 = scalar_select 0, %s8, %s6
  $region1: #{tpu_custom_call.1} parent=0
    #allocation2 [shape = 'u8[4096]{0}', space=vmem, size = 0x1000, scoped, tag = 'input window, operand 0, single buffered']
    #allocation3 [shape = 's32[1]{0}', space=sflag, size = 0x4, scoped, tag = 'scoped memory for tpu_custom_call.1']
    #allocation4 [shape = 's32[1]{0}', space=sflag, size = 0x4, scoped, tag = 'scoped memory for tpu_custom_call.1']
    #allocation5 [shape = 'u8[65536]{0}', space=vmem, size = 0x10000, scoped, tag = 'input window, operand 1, single buffered']
    #allocation6 [shape = 's32[1]{0}', space=sflag, size = 0x4, scoped, tag = 'scoped memory for tpu_custom_call.1']
    #allocation7 [shape = 'u8[65536]{0}', space=vmem, size = 0x10000, scoped, tag = 'input window, operand 3, single buffered']
    #allocation8 [shape = 'u8[4096]{0}', space=vmem, size = 0x1000, scoped, tag = 'output window, operand 0, single buffered']
    %10 = vsyncpa [#allocation3], 0
    %11 = vsyncpa [#allocation6], 0
    %12 = vsyncpa [#allocation4], 0
    // Predicated region
    $region2: #{tpu_custom_call.1} parent=1 // pred_check
      _
    $region3: #{tpu_custom_call.1} parent=1 // pred_check_branch
      %14 = sbr.rel (0) target = $region5
    $region4: #{tpu_custom_call.1} parent=1 // pred_region
      %s16 = ssub.s32 128, 128
      %17 = vsyncadd [#allocation3], %s16
      %s19 = sshll.u32 [#allocation2], 4
      %s20 = int_to_ptr.vmem [resolvable:$true] %s19
      %22 = dma.hbm_to_vmem [thread:$0]  %s0, 128, %s20, [#allocation3]
    $region5: #{tpu_custom_call.1} parent=1 // pred_fallthru
      _
    // Predicated region
    $region6: #{tpu_custom_call.1} parent=1 // pred_check
      _
    $region7: #{tpu_custom_call.1} parent=1 // pred_check_branch
      %24 = sbr.rel (0) target = $region9
    $region8: #{tpu_custom_call.1} parent=1 // pred_region
      %s26 = ssub.s32 2048, 2048
      %27 = vsyncadd [#allocation6], %s26
      %s28 = sshll.u32 [#allocation5], 4
      %s29 = int_to_ptr.vmem [resolvable:$true] %s28
      %34 = dma.hbm_to_vmem [thread:$0]  %s1, 2048, %s29, [#allocation6], 128, 128, 8
    $region9: #{tpu_custom_call.1} parent=1 // pred_fallthru
      _
    // Predicated region
    $region10: #{tpu_custom_call.1} parent=1 // pred_check
      _
    $region11: #{tpu_custom_call.1} parent=1 // pred_check_branch
      %36 = sbr.rel (0) target = $region13
    $region12: #{tpu_custom_call.1} parent=1 // pred_region
      _
    $region13: #{tpu_custom_call.1} parent=1 // pred_fallthru
      _
    // Predicated region
    $region14: #{tpu_custom_call.1} parent=1 // pred_check
      _
    $region15: #{tpu_custom_call.1} parent=1 // pred_check_branch
      %38 = sbr.rel (0) target = $region17
    $region16: #{tpu_custom_call.1} parent=1 // pred_region
      %s40 = ssub.s32 2048, 2048
      %41 = vsyncadd [#allocation6], %s40
      %s42 = sshll.u32 [#allocation7], 4
      %s43 = int_to_ptr.vmem [resolvable:$true] %s42
      %48 = dma.hbm_to_vmem [thread:$0]  %s3, 2048, %s43, [#allocation6], 128, 128, 8
    $region17: #{tpu_custom_call.1} parent=1 // pred_fallthru
      _
    // Predicated region
    $region18: #{tpu_custom_call.1} parent=1 // pred_check
      _
    $region19: #{tpu_custom_call.1} parent=1 // pred_check_branch
      %50 = sbr.rel (0) target = $region21
    $region20: #{tpu_custom_call.1} parent=1 // pred_region
      _
    $region21: #{tpu_custom_call.1} parent=1 // pred_fallthru
      _
    // Predicated region
    $region22: #{tpu_custom_call.1} parent=1 // pred_check
      _
    $region23: #{tpu_custom_call.1} parent=1 // pred_check_branch
      %52 = sbr.rel (0) target = $region25
    $region24: #{tpu_custom_call.1} parent=1 // pred_region
      %53 = dma.done [#allocation3], 128
    $region25: #{tpu_custom_call.1} parent=1 // pred_fallthru
      _
    // Predicated region
    $region26: #{tpu_custom_call.1} parent=1 // pred_check
      _
    $region27: #{tpu_custom_call.1} parent=1 // pred_check_branch
      %55 = sbr.rel (0) target = $region29
    $region28: #{tpu_custom_call.1} parent=1 // pred_region
      %56 = dma.done [#allocation6], 2048
    $region29: #{tpu_custom_call.1} parent=1 // pred_fallthru
      _
    // Predicated region
    $region30: #{tpu_custom_call.1} parent=1 // pred_check
      _
    $region31: #{tpu_custom_call.1} parent=1 // pred_check_branch
      %58 = sbr.rel (0) target = $region33
    $region32: #{tpu_custom_call.1} parent=1 // pred_region
      %59 = dma.done [#allocation6], 2048
    $region33: #{tpu_custom_call.1} parent=1 // pred_fallthru
      _
    %v60 = vld [vmem:[#allocation2] sm:$0xff]
    %v61 = vld [vmem:[#allocation5] sm:$0xff]
    %v62 = vld [vmem:[#allocation5 + $0x8] sm:$0xff]
    %v63 = vld [vmem:[#allocation5 + $0x10] sm:$0xff]
    %v64 = vld [vmem:[#allocation5 + $0x18] sm:$0xff]
    %v65 = vld [vmem:[#allocation5 + $0x20] sm:$0xff]
    %v66 = vld [vmem:[#allocation5 + $0x28] sm:$0xff]
    %v67 = vld [vmem:[#allocation5 + $0x30] sm:$0xff]
    %v68 = vld [vmem:[#allocation5 + $0x38] sm:$0xff]
    %v69 = vld [vmem:[#allocation5 + $0x40] sm:$0xff]
    %v70 = vld [vmem:[#allocation5 + $0x48] sm:$0xff]
    %v71 = vld [vmem:[#allocation5 + $0x50] sm:$0xff]
    %v72 = vld [vmem:[#allocation5 + $0x58] sm:$0xff]
    %v73 = vld [vmem:[#allocation5 + $0x60] sm:$0xff]
    %v74 = vld [vmem:[#allocation5 + $0x68] sm:$0xff]
    %v75 = vld [vmem:[#allocation5 + $0x70] sm:$0xff]
    %v76 = vld [vmem:[#allocation5 + $0x78] sm:$0xff]
    %v77 = vld [vmem:[%s2] sm:$0x1]
    %v79 = vlaneseq
    %v80 = vshrl.u32 %v79, 7
    %v81 = vsub.s32 0, %v80
    %v82 = vrot.slane %v77, %v81
    %84 = vmatprep.subr.mxu0 0.0
    %85 = vmatpush1.msra.mxu0 %v76
    %86 = vmatprep.subr.mxu0 0.0
    %87 = vmatpush1.msra.mxu0 %v75
    %88 = vmatprep.subr.mxu0 0.0
    %89 = vmatpush1.msra.mxu0 %v74
    %90 = vmatprep.subr.mxu0 0.0
    %91 = vmatpush1.msra.mxu0 %v73
    %92 = vmatprep.subr.mxu0 0.0
    %93 = vmatpush1.msra.mxu0 %v72
    %94 = vmatprep.subr.mxu0 0.0
    %95 = vmatpush1.msra.mxu0 %v71
    %96 = vmatprep.subr.mxu0 0.0
    %97 = vmatpush1.msra.mxu0 %v70
    %98 = vmatprep.subr.mxu0 0.0
    %99 = vmatpush1.msra.mxu0 %v69
    %100 = vmatprep.subr.mxu0 0.0
    %101 = vmatpush1.msra.mxu0 %v68
    %102 = vmatprep.subr.mxu0 0.0
    %103 = vmatpush1.msra.mxu0 %v67
    %104 = vmatprep.subr.mxu0 0.0
    %105 = vmatpush1.msra.mxu0 %v66
    %106 = vmatprep.subr.mxu0 0.0
    %107 = vmatpush1.msra.mxu0 %v65
    %108 = vmatprep.subr.mxu0 0.0
    %109 = vmatpush1.msra.mxu0 %v64
    %110 = vmatprep.subr.mxu0 0.0
    %111 = vmatpush1.msra.mxu0 %v63
    %112 = vmatprep.subr.mxu0 0.0
    %113 = vmatpush1.msra.mxu0 %v62
    %114 = vmatprep.subr.mxu0 0.0
    %115 = vmatpush1.msra.mxu0 %v61
    %116 = vmatprep.subr.mxu0 0.0
    %117 = vmatpush2.msra.mxu0 0.0
    %118 = vmatprep.subr.mxu0 0.0
    %119 = vmatpush2.msra.mxu0 0.0
    %120 = vmatprep.subr.mxu0 0.0
    %121 = vmatpush2.msra.mxu0 0.0
    %122 = vmatprep.subr.mxu0 0.0
    %123 = vmatpush2.msra.mxu0 0.0
    %124 = vmatprep.subr.mxu0 0.0
    %125 = vmatpush2.msra.mxu0 0.0
    %126 = vmatprep.subr.mxu0 0.0
    %127 = vmatpush2.msra.mxu0 0.0
    %128 = vmatprep.subr.mxu0 0.0
    %129 = vmatpush2.msra.mxu0 0.0
    %130 = vmatprep.subr.mxu0 0.0
    %131 = vmatpush2.msra.mxu0 0.0
    %132 = vmatprep.subr.mxu0 0.0
    %133 = vmatpush2.msra.mxu0 0.0
    %134 = vmatprep.subr.mxu0 0.0
    %135 = vmatpush2.msra.mxu0 0.0
    %136 = vmatprep.subr.mxu0 0.0
    %137 = vmatpush2.msra.mxu0 0.0
    %138 = vmatprep.subr.mxu0 0.0
    %139 = vmatpush2.msra.mxu0 0.0
    %140 = vmatprep.subr.mxu0 0.0
    %141 = vmatpush2.msra.mxu0 0.0
    %142 = vmatprep.subr.mxu0 0.0
    %143 = vmatpush2.msra.mxu0 0.0
    %144 = vmatprep.subr.mxu0 0.0
    %145 = vmatpush2.msra.mxu0 0.0
    %146 = vmatprep.subr.mxu0 0.0
    %147 = vmatpush2.msra.mxu0 0.0
    %148 = vmatprep.mubr.f32.mxu0 0.0
    %149 = vmatmul.mubr.f32.gmra.mxu0 %v60
    %v150 = vpop.f32.mrf.mxu0
    %v151 = vadd.f32 %v82, %v150
    %v152 = vpop.f32.mrf.mxu0
    %153 = vdwg.mxu0
    %v154 = vmax.f32 %v151, 0.0
    %v155 = vld [vmem:[#allocation7] sm:$0xff]
    %v156 = vld [vmem:[#allocation7 + $0x8] sm:$0xff]
    %v157 = vld [vmem:[#allocation7 + $0x10] sm:$0xff]
    %v158 = vld [vmem:[#allocation7 + $0x18] sm:$0xff]
    %v159 = vld [vmem:[#allocation7 + $0x20] sm:$0xff]
    %v160 = vld [vmem:[#allocation7 + $0x28] sm:$0xff]
    %v161 = vld [vmem:[#allocation7 + $0x30] sm:$0xff]
    %v162 = vld [vmem:[#allocation7 + $0x38] sm:$0xff]
    %v163 = vld [vmem:[#allocation7 + $0x40] sm:$0xff]
    %v164 = vld [vmem:[#allocation7 + $0x48] sm:$0xff]
    %v165 = vld [vmem:[#allocation7 + $0x50] sm:$0xff]
    %v166 = vld [vmem:[#allocation7 + $0x58] sm:$0xff]
    %v167 = vld [vmem:[#allocation7 + $0x60] sm:$0xff]
    %v168 = vld [vmem:[#allocation7 + $0x68] sm:$0xff]
    %v169 = vld [vmem:[#allocation7 + $0x70] sm:$0xff]
    %v170 = vld [vmem:[#allocation7 + $0x78] sm:$0xff]
    %v171 = vld [vmem:[%s4] sm:$0x1]
    %v173 = vlaneseq
    %v174 = vshrl.u32 %v173, 7
    %v175 = vsub.s32 0, %v174
    %v176 = vrot.slane %v171, %v175
    %178 = vmatprep.subr.mxu0 0.0
    %179 = vmatpush1.msra.mxu0 %v170
    %180 = vmatprep.subr.mxu0 0.0
    %181 = vmatpush1.msra.mxu0 %v169
    %182 = vmatprep.subr.mxu0 0.0
    %183 = vmatpush1.msra.mxu0 %v168
    %184 = vmatprep.subr.mxu0 0.0
    %185 = vmatpush1.msra.mxu0 %v167
    %186 = vmatprep.subr.mxu0 0.0
    %187 = vmatpush1.msra.mxu0 %v166
    %188 = vmatprep.subr.mxu0 0.0
    %189 = vmatpush1.msra.mxu0 %v165
    %190 = vmatprep.subr.mxu0 0.0
    %191 = vmatpush1.msra.mxu0 %v164
    %192 = vmatprep.subr.mxu0 0.0
    %193 = vmatpush1.msra.mxu0 %v163
    %194 = vmatprep.subr.mxu0 0.0
    %195 = vmatpush1.msra.mxu0 %v162
    %196 = vmatprep.subr.mxu0 0.0
    %197 = vmatpush1.msra.mxu0 %v161
    %198 = vmatprep.subr.mxu0 0.0
    %199 = vmatpush1.msra.mxu0 %v160
    %200 = vmatprep.subr.mxu0 0.0
    %201 = vmatpush1.msra.mxu0 %v159
    %202 = vmatprep.subr.mxu0 0.0
    %203 = vmatpush1.msra.mxu0 %v158
    %204 = vmatprep.subr.mxu0 0.0
    %205 = vmatpush1.msra.mxu0 %v157
    %206 = vmatprep.subr.mxu0 0.0
    %207 = vmatpush1.msra.mxu0 %v156
    %208 = vmatprep.subr.mxu0 0.0
    %209 = vmatpush1.msra.mxu0 %v155
    %210 = vmatprep.subr.mxu0 0.0
    %211 = vmatpush2.msra.mxu0 0.0
    %212 = vmatprep.subr.mxu0 0.0
    %213 = vmatpush2.msra.mxu0 0.0
    %214 = vmatprep.subr.mxu0 0.0
    %215 = vmatpush2.msra.mxu0 0.0
    %216 = vmatprep.subr.mxu0 0.0
    %217 = vmatpush2.msra.mxu0 0.0
    %218 = vmatprep.subr.mxu0 0.0
    %219 = vmatpush2.msra.mxu0 0.0
    %220 = vmatprep.subr.mxu0 0.0
    %221 = vmatpush2.msra.mxu0 0.0
    %222 = vmatprep.subr.mxu0 0.0
    %223 = vmatpush2.msra.mxu0 0.0
    %224 = vmatprep.subr.mxu0 0.0
    %225 = vmatpush2.msra.mxu0 0.0
    %226 = vmatprep.subr.mxu0 0.0
    %227 = vmatpush2.msra.mxu0 0.0
    %228 = vmatprep.subr.mxu0 0.0
    %229 = vmatpush2.msra.mxu0 0.0
    %230 = vmatprep.subr.mxu0 0.0
    %231 = vmatpush2.msra.mxu0 0.0
    %232 = vmatprep.subr.mxu0 0.0
    %233 = vmatpush2.msra.mxu0 0.0
    %234 = vmatprep.subr.mxu0 0.0
    %235 = vmatpush2.msra.mxu0 0.0
    %236 = vmatprep.subr.mxu0 0.0
    %237 = vmatpush2.msra.mxu0 0.0
    %238 = vmatprep.subr.mxu0 0.0
    %239 = vmatpush2.msra.mxu0 0.0
    %240 = vmatprep.subr.mxu0 0.0
    %241 = vmatpush2.msra.mxu0 0.0
    %242 = vmatprep.mubr.f32.mxu0 0.0
    %243 = vmatmul.mubr.f32.gmra.mxu0 %v154
    %v244 = vpop.f32.mrf.mxu0
    %v245 = vadd.f32 %v176, %v244
    %v246 = vpop.f32.mrf.mxu0
    %247 = vdwg.mxu0
    %v248 = vmax.f32 %v245, 0.0
    %249 = vst [vmem:[#allocation8] sm:$0xff] %v248
    // Predicated region
    $region34: #{tpu_custom_call.1} parent=1 // pred_check
      _
    $region35: #{tpu_custom_call.1} parent=1 // pred_check_branch
      %251 = sbr.rel (0) target = $region37
    $region36: #{tpu_custom_call.1} parent=1 // pred_region
      %s253 = ssub.s32 128, 128
      %254 = vsyncadd [#allocation4], %s253
      %s256 = sshll.u32 [#allocation8], 4
      %s257 = int_to_ptr.vmem [resolvable:$true] %s256
      %259 = dma.vmem_to_hbm [thread:$0]  %s257, 128, %s5, [#allocation4]
    $region37: #{tpu_custom_call.1} parent=1 // pred_fallthru
      _
    // Predicated region
    $region38: #{tpu_custom_call.1} parent=1 // pred_check
      _
    $region39: #{tpu_custom_call.1} parent=1 // pred_check_branch
      %261 = sbr.rel (0) target = $region41
    $region40: #{tpu_custom_call.1} parent=1 // pred_region
      %262 = dma.done [#allocation4], 128
    $region41: #{tpu_custom_call.1} parent=1 // pred_fallthru
      _
    %263 = vsyncpa [#allocation3], 1
    %264 = vsyncpa [#allocation6], 1
    %265 = vsyncpa [#allocation4], 1

// kernel: tpu_custom_call.1
$region0: #{tpu_custom_call.1}
  #allocation0 [shape = 'u32[]', space=smem, size = 0x4, offset = 0x4, fixed_abs, tag = 'smem constant byte address 0x4 - core index']
  #allocation1 [shape = 'u32[144,128]{1,0:T(1,128)}', space=vmem, size = 0x12000, scoped, tag = 'internal scratch']
  %s0 = inlined_call_operand.hbm [shape: f32[8,128], index: 0, kind: input, shape index: {}]
  %s1 = inlined_call_operand.hbm [shape: f32[128,128], index: 1, kind: input, shape index: {}]
  %s2 = inlined_call_operand.vmem [shape: f32[1,128], index: 2, kind: input, shape index: {}]
  %s3 = inlined_call_operand.hbm [shape: f32[128,128], index: 3, kind: input, shape index: {}]
  %s4 = inlined_call_operand.vmem [shape: f32[1,128], index: 4, kind: input, shape index: {}]
  %s5 = inlined_call_operand.hbm [shape: f32[8,128], index: 5, kind: output, shape index: {}]
  %s6 = sld [smem:[#allocation0]]
  $region42: #{tpu_custom_call.1} parent=0
    _
  %s8 = ssub.s32 1, %s6
  %s9 = scalar_select 0, %s8, %s6
  $region1: #{tpu_custom_call.1} parent=0
    #allocation2 [shape = 'u8[4096]{0}', space=vmem, size = 0x1000, scoped, tag = 'input window, operand 0, single buffered']
    #allocation3 [shape = 's32[1]{0}', space=sflag, size = 0x4, scoped, tag = 'scoped memory for tpu_custom_call.1']
    #allocation4 [shape = 's32[1]{0}', space=sflag, size = 0x4, scoped, tag = 'scoped memory for tpu_custom_call.1']
    #allocation5 [shape = 'u8[65536]{0}', space=vmem, size = 0x10000, scoped, tag = 'input window, operand 1, single buffered']
    #allocation6 [shape = 's32[1]{0}', space=sflag, size = 0x4, scoped, tag = 'scoped memory for tpu_custom_call.1']
    #allocation7 [shape = 'u8[65536]{0}', space=vmem, size = 0x10000, scoped, tag = 'input window, operand 3, single buffered']
    #allocation8 [shape = 'u8[4096]{0}', space=vmem, size = 0x1000, scoped, tag = 'output window, operand 0, single buffered']
    %10 = vsyncpa [#allocation3], 0
    %11 = vsyncpa [#allocation6], 0
    %12 = vsyncpa [#allocation4], 0
    // Predicated region
    $region2: #{tpu_custom_call.1} parent=1 // pred_check
      _
    $region3: #{tpu_custom_call.1} parent=1 // pred_check_branch
      %14 = sbr.rel (0) target = $region5
    $region4: #{tpu_custom_call.1} parent=1 // pred_region
      %s16 = ssub.s32 128, 128
      %17 = vsyncadd [#allocation3], %s16
      %s19 = sshll.u32 [#allocation2], 4
      %s20 = int_to_ptr.vmem [resolvable:$true] %s19
      %22 = dma.hbm_to_vmem [thread:$0]  %s0, 128, %s20, [#allocation3]
    $region5: #{tpu_custom_call.1} parent=1 // pred_fallthru
      _
    // Predicated region
    $region6: #{tpu_custom_call.1} parent=1 // pred_check
      _
    $region7: #{tpu_custom_call.1} parent=1 // pred_check_branch
      %24 = sbr.rel (0) target = $region9
    $region8: #{tpu_custom_call.1} parent=1 // pred_region
      %s26 = ssub.s32 2048, 2048
      %27 = vsyncadd [#allocation6], %s26
      %s28 = sshll.u32 [#allocation5], 4
      %s29 = int_to_ptr.vmem [resolvable:$true] %s28
      %34 = dma.hbm_to_vmem [thread:$0]  %s1, 2048, %s29, [#allocation6], 128, 128, 8
    $region9: #{tpu_custom_call.1} parent=1 // pred_fallthru
      _
    // Predicated region
    $region10: #{tpu_custom_call.1} parent=1 // pred_check
      _
    $region11: #{tpu_custom_call.1} parent=1 // pred_check_branch
      %36 = sbr.rel (0) target = $region13
    $region12: #{tpu_custom_call.1} parent=1 // pred_region
      _
    $region13: #{tpu_custom_call.1} parent=1 // pred_fallthru
      _
    // Predicated region
    $region14: #{tpu_custom_call.1} parent=1 // pred_check
      _
    $region15: #{tpu_custom_call.1} parent=1 // pred_check_branch
      %38 = sbr.rel (0) target = $region17
    $region16: #{tpu_custom_call.1} parent=1 // pred_region
      %s40 = ssub.s32 2048, 2048
      %41 = vsyncadd [#allocation6], %s40
      %s42 = sshll.u32 [#allocation7], 4
      %s43 = int_to_ptr.vmem [resolvable:$true] %s42
      %48 = dma.hbm_to_vmem [thread:$0]  %s3, 2048, %s43, [#allocation6], 128, 128, 8
    $region17: #{tpu_custom_call.1} parent=1 // pred_fallthru
      _
    // Predicated region
    $region18: #{tpu_custom_call.1} parent=1 // pred_check
      _
    $region19: #{tpu_custom_call.1} parent=1 // pred_check_branch
      %50 = sbr.rel (0) target = $region21
    $region20: #{tpu_custom_call.1} parent=1 // pred_region
      _
    $region21: #{tpu_custom_call.1} parent=1 // pred_fallthru
      _
    // Predicated region
    $region22: #{tpu_custom_call.1} parent=1 // pred_check
      _
    $region23: #{tpu_custom_call.1} parent=1 // pred_check_branch
      %52 = sbr.rel (0) target = $region25
    $region24: #{tpu_custom_call.1} parent=1 // pred_region
      %53 = dma.done [#allocation3], 128
    $region25: #{tpu_custom_call.1} parent=1 // pred_fallthru
      _
    // Predicated region
    $region26: #{tpu_custom_call.1} parent=1 // pred_check
      _
    $region27: #{tpu_custom_call.1} parent=1 // pred_check_branch
      %55 = sbr.rel (0) target = $region29
    $region28: #{tpu_custom_call.1} parent=1 // pred_region
      %56 = dma.done [#allocation6], 2048
    $region29: #{tpu_custom_call.1} parent=1 // pred_fallthru
      _
    // Predicated region
    $region30: #{tpu_custom_call.1} parent=1 // pred_check
      _
    $region31: #{tpu_custom_call.1} parent=1 // pred_check_branch
      %58 = sbr.rel (0) target = $region33
    $region32: #{tpu_custom_call.1} parent=1 // pred_region
      %59 = dma.done [#allocation6], 2048
    $region33: #{tpu_custom_call.1} parent=1 // pred_fallthru
      _
    %v60 = vld [vmem:[#allocation2] sm:$0xff]
    %v61 = vld [vmem:[#allocation5] sm:$0xff]
    %v62 = vld [vmem:[#allocation5 + $0x8] sm:$0xff]
    %v63 = vld [vmem:[#allocation5 + $0x10] sm:$0xff]
    %v64 = vld [vmem:[#allocation5 + $0x18] sm:$0xff]
    %v65 = vld [vmem:[#allocation5 + $0x20] sm:$0xff]
    %v66 = vld [vmem:[#allocation5 + $0x28] sm:$0xff]
    %v67 = vld [vmem:[#allocation5 + $0x30] sm:$0xff]
    %v68 = vld [vmem:[#allocation5 + $0x38] sm:$0xff]
    %v69 = vld [vmem:[#allocation5 + $0x40] sm:$0xff]
    %v70 = vld [vmem:[#allocation5 + $0x48] sm:$0xff]
    %v71 = vld [vmem:[#allocation5 + $0x50] sm:$0xff]
    %v72 = vld [vmem:[#allocation5 + $0x58] sm:$0xff]
    %v73 = vld [vmem:[#allocation5 + $0x60] sm:$0xff]
    %v74 = vld [vmem:[#allocation5 + $0x68] sm:$0xff]
    %v75 = vld [vmem:[#allocation5 + $0x70] sm:$0xff]
    %v76 = vld [vmem:[#allocation5 + $0x78] sm:$0xff]
    %v77 = vld [vmem:[%s2] sm:$0x1]
    %v79 = vlaneseq
    %v80 = vshrl.u32 %v79, 7
    %v81 = vsub.s32 0, %v80
    %v82 = vrot.slane %v77, %v81
    %84 = vmatprep.subr.mxu0 0.0
    %85 = vmatpush1.msra.mxu0 %v76
    %86 = vmatprep.subr.mxu0 0.0
    %87 = vmatpush1.msra.mxu0 %v75
    %88 = vmatprep.subr.mxu0 0.0
    %89 = vmatpush1.msra.mxu0 %v74
    %90 = vmatprep.subr.mxu0 0.0
    %91 = vmatpush1.msra.mxu0 %v73
    %92 = vmatprep.subr.mxu0 0.0
    %93 = vmatpush1.msra.mxu0 %v72
    %94 = vmatprep.subr.mxu0 0.0
    %95 = vmatpush1.msra.mxu0 %v71
    %96 = vmatprep.subr.mxu0 0.0
    %97 = vmatpush1.msra.mxu0 %v70
    %98 = vmatprep.subr.mxu0 0.0
    %99 = vmatpush1.msra.mxu0 %v69
    %100 = vmatprep.subr.mxu0 0.0
    %101 = vmatpush1.msra.mxu0 %v68
    %102 = vmatprep.subr.mxu0 0.0
    %103 = vmatpush1.msra.mxu0 %v67
    %104 = vmatprep.subr.mxu0 0.0
    %105 = vmatpush1.msra.mxu0 %v66
    %106 = vmatprep.subr.mxu0 0.0
    %107 = vmatpush1.msra.mxu0 %v65
    %108 = vmatprep.subr.mxu0 0.0
    %109 = vmatpush1.msra.mxu0 %v64
    %110 = vmatprep.subr.mxu0 0.0
    %111 = vmatpush1.msra.mxu0 %v63
    %112 = vmatprep.subr.mxu0 0.0
    %113 = vmatpush1.msra.mxu0 %v62
    %114 = vmatprep.subr.mxu0 0.0
    %115 = vmatpush1.msra.mxu0 %v61
    %116 = vmatprep.subr.mxu0 0.0
    %117 = vmatpush2.msra.mxu0 0.0
    %118 = vmatprep.subr.mxu0 0.0
    %119 = vmatpush2.msra.mxu0 0.0
    %120 = vmatprep.subr.mxu0 0.0
    %121 = vmatpush2.msra.mxu0 0.0
    %122 = vmatprep.subr.mxu0 0.0
    %123 = vmatpush2.msra.mxu0 0.0
    %124 = vmatprep.subr.mxu0 0.0
    %125 = vmatpush2.msra.mxu0 0.0
    %126 = vmatprep.subr.mxu0 0.0
    %127 = vmatpush2.msra.mxu0 0.0
    %128 = vmatprep.subr.mxu0 0.0
    %129 = vmatpush2.msra.mxu0 0.0
    %130 = vmatprep.subr.mxu0 0.0
    %131 = vmatpush2.msra.mxu0 0.0
    %132 = vmatprep.subr.mxu0 0.0
    %133 = vmatpush2.msra.mxu0 0.0
    %134 = vmatprep.subr.mxu0 0.0
    %135 = vmatpush2.msra.mxu0 0.0
    %136 = vmatprep.subr.mxu0 0.0
    %137 = vmatpush2.msra.mxu0 0.0
    %138 = vmatprep.subr.mxu0 0.0
    %139 = vmatpush2.msra.mxu0 0.0
    %140 = vmatprep.subr.mxu0 0.0
    %141 = vmatpush2.msra.mxu0 0.0
    %142 = vmatprep.subr.mxu0 0.0
    %143 = vmatpush2.msra.mxu0 0.0
    %144 = vmatprep.subr.mxu0 0.0
    %145 = vmatpush2.msra.mxu0 0.0
    %146 = vmatprep.subr.mxu0 0.0
    %147 = vmatpush2.msra.mxu0 0.0
    %148 = vmatprep.mubr.f32.mxu0 0.0
    %149 = vmatmul.mubr.f32.gmra.mxu0 %v60
    %v150 = vpop.f32.mrf.mxu0
    %v151 = vadd.f32 %v82, %v150
    %v152 = vpop.f32.mrf.mxu0
    %153 = vdwg.mxu0
    %v154 = vmax.f32 %v151, 0.0
    %v155 = vld [vmem:[#allocation7] sm:$0xff]
    %v156 = vld [vmem:[#allocation7 + $0x8] sm:$0xff]
    %v157 = vld [vmem:[#allocation7 + $0x10] sm:$0xff]
    %v158 = vld [vmem:[#allocation7 + $0x18] sm:$0xff]
    %v159 = vld [vmem:[#allocation7 + $0x20] sm:$0xff]
    %v160 = vld [vmem:[#allocation7 + $0x28] sm:$0xff]
    %v161 = vld [vmem:[#allocation7 + $0x30] sm:$0xff]
    %v162 = vld [vmem:[#allocation7 + $0x38] sm:$0xff]
    %v163 = vld [vmem:[#allocation7 + $0x40] sm:$0xff]
    %v164 = vld [vmem:[#allocation7 + $0x48] sm:$0xff]
    %v165 = vld [vmem:[#allocation7 + $0x50] sm:$0xff]
    %v166 = vld [vmem:[#allocation7 + $0x58] sm:$0xff]
    %v167 = vld [vmem:[#allocation7 + $0x60] sm:$0xff]
    %v168 = vld [vmem:[#allocation7 + $0x68] sm:$0xff]
    %v169 = vld [vmem:[#allocation7 + $0x70] sm:$0xff]
    %v170 = vld [vmem:[#allocation7 + $0x78] sm:$0xff]
    %v171 = vld [vmem:[%s4] sm:$0x1]
    %v173 = vlaneseq
    %v174 = vshrl.u32 %v173, 7
    %v175 = vsub.s32 0, %v174
    %v176 = vrot.slane %v171, %v175
    %178 = vmatprep.subr.mxu0 0.0
    %179 = vmatpush1.msra.mxu0 %v170
    %180 = vmatprep.subr.mxu0 0.0
    %181 = vmatpush1.msra.mxu0 %v169
    %182 = vmatprep.subr.mxu0 0.0
    %183 = vmatpush1.msra.mxu0 %v168
    %184 = vmatprep.subr.mxu0 0.0
    %185 = vmatpush1.msra.mxu0 %v167
    %186 = vmatprep.subr.mxu0 0.0
    %187 = vmatpush1.msra.mxu0 %v166
    %188 = vmatprep.subr.mxu0 0.0
    %189 = vmatpush1.msra.mxu0 %v165
    %190 = vmatprep.subr.mxu0 0.0
    %191 = vmatpush1.msra.mxu0 %v164
    %192 = vmatprep.subr.mxu0 0.0
    %193 = vmatpush1.msra.mxu0 %v163
    %194 = vmatprep.subr.mxu0 0.0
    %195 = vmatpush1.msra.mxu0 %v162
    %196 = vmatprep.subr.mxu0 0.0
    %197 = vmatpush1.msra.mxu0 %v161
    %198 = vmatprep.subr.mxu0 0.0
    %199 = vmatpush1.msra.mxu0 %v160
    %200 = vmatprep.subr.mxu0 0.0
    %201 = vmatpush1.msra.mxu0 %v159
    %202 = vmatprep.subr.mxu0 0.0
    %203 = vmatpush1.msra.mxu0 %v158
    %204 = vmatprep.subr.mxu0 0.0
    %205 = vmatpush1.msra.mxu0 %v157
    %206 = vmatprep.subr.mxu0 0.0
    %207 = vmatpush1.msra.mxu0 %v156
    %208 = vmatprep.subr.mxu0 0.0
    %209 = vmatpush1.msra.mxu0 %v155
    %210 = vmatprep.subr.mxu0 0.0
    %211 = vmatpush2.msra.mxu0 0.0
    %212 = vmatprep.subr.mxu0 0.0
    %213 = vmatpush2.msra.mxu0 0.0
    %214 = vmatprep.subr.mxu0 0.0
    %215 = vmatpush2.msra.mxu0 0.0
    %216 = vmatprep.subr.mxu0 0.0
    %217 = vmatpush2.msra.mxu0 0.0
    %218 = vmatprep.subr.mxu0 0.0
    %219 = vmatpush2.msra.mxu0 0.0
    %220 = vmatprep.subr.mxu0 0.0
    %221 = vmatpush2.msra.mxu0 0.0
    %222 = vmatprep.subr.mxu0 0.0
    %223 = vmatpush2.msra.mxu0 0.0
    %224 = vmatprep.subr.mxu0 0.0
    %225 = vmatpush2.msra.mxu0 0.0
    %226 = vmatprep.subr.mxu0 0.0
    %227 = vmatpush2.msra.mxu0 0.0
    %228 = vmatprep.subr.mxu0 0.0
    %229 = vmatpush2.msra.mxu0 0.0
    %230 = vmatprep.subr.mxu0 0.0
    %231 = vmatpush2.msra.mxu0 0.0
    %232 = vmatprep.subr.mxu0 0.0
    %233 = vmatpush2.msra.mxu0 0.0
    %234 = vmatprep.subr.mxu0 0.0
    %235 = vmatpush2.msra.mxu0 0.0
    %236 = vmatprep.subr.mxu0 0.0
    %237 = vmatpush2.msra.mxu0 0.0
    %238 = vmatprep.subr.mxu0 0.0
    %239 = vmatpush2.msra.mxu0 0.0
    %240 = vmatprep.subr.mxu0 0.0
    %241 = vmatpush2.msra.mxu0 0.0
    %242 = vmatprep.mubr.f32.mxu0 0.0
    %243 = vmatmul.mubr.f32.gmra.mxu0 %v154
    %v244 = vpop.f32.mrf.mxu0
    %v245 = vadd.f32 %v176, %v244
    %v246 = vpop.f32.mrf.mxu0
    %247 = vdwg.mxu0
    %v248 = vmax.f32 %v245, 0.0
    %249 = vst [vmem:[#allocation8] sm:$0xff] %v248
    // Predicated region
    $region34: #{tpu_custom_call.1} parent=1 // pred_check
      _
    $region35: #{tpu_custom_call.1} parent=1 // pred_check_branch
      %251 = sbr.rel (0) target = $region37
    $region36: #{tpu_custom_call.1} parent=1 // pred_region
      %s253 = ssub.s32 128, 128
      %254 = vsyncadd [#allocation4], %s253
      %s256 = sshll.u32 [#allocation8], 4
      %s257 = int_to_ptr.vmem [resolvable:$true] %s256
      %259 = dma.vmem_to_hbm [thread:$0]  %s257, 128, %s5, [#allocation4]
    $region37: #{tpu_custom_call.1} parent=1 // pred_fallthru
      _
    // Predicated region
    $region38: #{tpu_custom_call.1} parent=1 // pred_check
      _
    $region39: #{tpu_custom_call.1} parent=1 // pred_check_branch
      %261 = sbr.rel (0) target = $region41
    $region40: #{tpu_custom_call.1} parent=1 // pred_region
      %262 = dma.done [#allocation4], 128
    $region41: #{tpu_custom_call.1} parent=1 // pred_fallthru
      _
    %263 = vsyncpa [#allocation3], 1
    %264 = vsyncpa [#allocation6], 1
    %265 = vsyncpa [#allocation4], 1

</llo_original>
